<compile_context>
chip_gen: v7x
topology: tpu7x:2x2x1
jax: 0.10.0
libtpu: 0.0.40
codegen_flags: <defaults>
</compile_context>

<pallas_src>
import functools

import jax
import jax.numpy as jnp
from jax import lax
from jax.experimental import pallas as pl
from jax.experimental.pallas import tpu as pltpu


def _round_up(x, m):
    return ((x + m - 1) // m) * m


def _linear_kernel(x_ref, w_ref, o_ref):
    """One grid step: o[i,j] += X[i, k-tile] @ W[j, k-tile].T (f32 accumulate)."""
    k = pl.program_id(2)

    @pl.when(k == 0)
    def _():
        o_ref[...] = jnp.zeros_like(o_ref)

    o_ref[...] += lax.dot_general(
        x_ref[...],
        w_ref[...],
        dimension_numbers=(((1,), (1,)), ((), ())),  # contract K of both tiles
        preferred_element_type=jnp.float32,
    )


@functools.partial(jax.jit, static_argnames=("compute_dtype",))
def ngram_forward(x, weight, *, compute_dtype=jnp.bfloat16):
    """x: (M, K); weight: (V, K) (PyTorch Linear layout). Returns (M, V) = x @ weight.T."""
    M, K = x.shape
    V, K_w = weight.shape
    assert K == K_w, "in_features mismatch"

    # Lane-dense tiles (last dims multiples of 128), sized so the per-step
    # footprint (2 inputs x 2 buffers + resident f32 output block) stays well
    # under the scoped-VMEM limit on v5e/v6e/v7x.
    tm = min(_round_up(M, 8), 256)
    tn = min(_round_up(V, 128), 256)
    tk = min(_round_up(K, 128), 512)
    Mp, Vp, Kp = _round_up(M, tm), _round_up(V, tn), _round_up(K, tk)

    # Cast to the MXU dtype and zero-pad to tile multiples. Zero K-padding
    # contributes 0 to the reduction; padded M/V rows/cols are sliced off.
    # NOTE: in a real deployment the weight cast/pad is done once at
    # parameter-load time, not per forward call (it is a constant parameter).
    xp = x.astype(compute_dtype)
    wp = weight.astype(compute_dtype)
    if (Mp, Kp) != (M, K):
        xp = jnp.pad(xp, ((0, Mp - M), (0, Kp - K)))
    if (Vp, Kp) != (V, K):
        wp = jnp.pad(wp, ((0, Vp - V), (0, Kp - K)))

    grid = (Mp // tm, Vp // tn, Kp // tk)
    bytes_per = jnp.dtype(compute_dtype).itemsize
    cost = pl.CostEstimate(
        flops=2 * M * K * V,
        transcendentals=0,
        bytes_accessed=M * K * bytes_per + V * K * bytes_per + M * V * 4,
    )

    out = pl.pallas_call(
        _linear_kernel,
        out_shape=jax.ShapeDtypeStruct((Mp, Vp), jnp.float32),
        grid_spec=pltpu.PrefetchScalarGridSpec(
            num_scalar_prefetch=0,
            grid=grid,
            in_specs=[
                pl.BlockSpec((tm, tk), lambda i, j, k: (i, k)),  # X tile
                pl.BlockSpec((tn, tk), lambda i, j, k: (j, k)),  # W tile, (V,K) layout
            ],
            out_specs=pl.BlockSpec((tm, tn), lambda i, j, k: (i, j)),
        ),
        compiler_params=pltpu.CompilerParams(
            dimension_semantics=("parallel", "parallel", "arbitrary"),
            vmem_limit_bytes=48 * 1024 * 1024,
        ),
        cost_estimate=cost,
    )(xp, wp)

    return out[:M, :V].astype(x.dtype)


if __name__ == "__main__":
    # Shapes consistent with NGramModel.__init__:
    vocab_size = 32
    batch_size = 8
    in_features = vocab_size * batch_size   # 256
    num_examples = 8                        # rows of X fed through the Linear

    key = jax.random.PRNGKey(0)
    kx, kw = jax.random.split(key)

    # torch.nn.init.normal_(w, mean=-1, std=1) equivalent.
    weight = jax.random.normal(kw, (vocab_size, in_features), jnp.float32) - 1.0
    x = jax.random.normal(kx, (num_examples, in_features), jnp.float32)

    out = ngram_forward(x, weight)
    out = jax.block_until_ready(out)

    # Reference (same math as torch F.linear with no bias). Kernel runs the
    # MXU in bf16 with f32 accumulation, so compare loosely against the f32
    # reference and tightly against a bf16/f32-acc reference.
    ref_f32 = x @ weight.T
    ref_bf16 = jnp.dot(
        x.astype(jnp.bfloat16), weight.astype(jnp.bfloat16).T,
        preferred_element_type=jnp.float32)
    assert out.shape == (num_examples, vocab_size)
    assert jnp.allclose(out, ref_f32, rtol=2e-2, atol=2.5e-1), "mismatch vs f32 ref"
    assert jnp.allclose(out, ref_bf16, rtol=5e-3, atol=5e-2), "mismatch vs bf16 ref"

    print("KERNEL_OK")
</pallas_src>

<mosaic_0001>
module attributes {stable_mosaic.version = 11 : i64} {
  func.func @_linear_kernel(%arg0: i32, %arg1: i32, %arg2: i32, %arg3: memref<8x256xbf16, #tpu.memory_space<vmem>>, %arg4: memref<128x256xbf16, #tpu.memory_space<vmem>>, %arg5: memref<8x128xf32, #tpu.memory_space<vmem>>) attributes {dimension_semantics = [#tpu.dimension_semantics<parallel>, #tpu.dimension_semantics<parallel>, #tpu.dimension_semantics<arbitrary>], iteration_bounds = array<i64: 1, 1, 1>, scalar_prefetch = 0 : i64, scratch_operands = 0 : i64, tpu.core_type = #tpu.core_type<tc>, window_params = [{transform_indices = @transform_0, window_bounds = array<i64: 8, 256>}, {transform_indices = @transform_1, window_bounds = array<i64: 128, 256>}, {transform_indices = @transform_2, window_bounds = array<i64: 8, 128>}]} {
    %c0_i32 = arith.constant 0 : i32
    %0 = arith.cmpi eq, %arg2, %c0_i32 : i32
    %1 = arith.extui %0 : i1 to i32
    %c0_i32_0 = arith.constant 0 : i32
    %2 = arith.cmpi ne, %1, %c0_i32_0 : i32
    scf.if %2 {
      %cst_8 = arith.constant 0.000000e+00 : f32
      %9 = vector.broadcast %cst_8 : f32 to vector<8x128xf32>
      %c0_9 = arith.constant 0 : index
      %c0_10 = arith.constant 0 : index
      %10 = vector.load %arg5[%c0_9, %c0_10] : memref<8x128xf32, #tpu.memory_space<vmem>>, vector<8x128xf32>
      tpu.vector_store %arg5[%c0_9, %c0_10], %9 {strides = array<i32>} : memref<8x128xf32, #tpu.memory_space<vmem>>, vector<8x128xf32>,
    } else {
    }
    %c0 = arith.constant 0 : index
    %c0_1 = arith.constant 0 : index
    %3 = vector.load %arg5[%c0, %c0_1] : memref<8x128xf32, #tpu.memory_space<vmem>>, vector<8x128xf32>
    %c0_2 = arith.constant 0 : index
    %c0_3 = arith.constant 0 : index
    %4 = vector.load %arg3[%c0_2, %c0_3] : memref<8x256xbf16, #tpu.memory_space<vmem>>, vector<8x256xbf16>
    %c0_4 = arith.constant 0 : index
    %c0_5 = arith.constant 0 : index
    %5 = vector.load %arg4[%c0_4, %c0_5] : memref<128x256xbf16, #tpu.memory_space<vmem>>, vector<128x256xbf16>
    %cst = arith.constant dense<0.000000e+00> : vector<8x128xf32>
    %6 = tpu.matmul %4, %5, %cst {dimension_numbers = #tpu.dot_dimension_numbers<[1], [1], [0], [0], [0, 0, 1, 0], [], []>} : vector<8x256xbf16>, vector<128x256xbf16>, vector<8x128xf32> -> vector<8x128xf32>
    %7 = arith.addf %3, %6 : vector<8x128xf32>
    %c0_6 = arith.constant 0 : index
    %c0_7 = arith.constant 0 : index
    %8 = vector.load %arg5[%c0_6, %c0_7] : memref<8x128xf32, #tpu.memory_space<vmem>>, vector<8x128xf32>
    tpu.vector_store %arg5[%c0_6, %c0_7], %7 {strides = array<i32>} : memref<8x128xf32, #tpu.memory_space<vmem>>, vector<8x128xf32>,
    return
  }
  func.func @transform_0(%arg0: i32, %arg1: i32, %arg2: i32) -> (i32, i32) {
    %c0_i32 = arith.constant 0 : i32
    return %arg0, %arg2 : i32, i32
  }
  func.func @transform_1(%arg0: i32, %arg1: i32, %arg2: i32) -> (i32, i32) {
    %c0_i32 = arith.constant 0 : i32
    return %arg1, %arg2 : i32, i32
  }
  func.func @transform_2(%arg0: i32, %arg1: i32, %arg2: i32) -> (i32, i32) {
    %c0_i32 = arith.constant 0 : i32
    return %arg0, %arg1 : i32, i32
  }
}

</mosaic_0001>

<llo_original>
// kernel: ngram_forward.1
$region0: #{ngram_forward.1}
  #allocation0 [shape = 'u32[]', space=smem, size = 0x4, offset = 0x4, fixed_abs, tag = 'smem constant byte address 0x4 - core index']
  #allocation1 [shape = 'u32[144,128]{1,0:T(1,128)}', space=vmem, size = 0x12000, scoped, tag = 'internal scratch']
  %s0 = inlined_call_operand.vmem [shape: bf16[8,256], index: 0, kind: input, shape index: {}]
  %s1 = inlined_call_operand.vmem [shape: bf16[128,256], index: 1, kind: input, shape index: {}]
  %s2 = inlined_call_operand.hbm [shape: f32[8,128], index: 2, kind: output, shape index: {}]
  %s3 = sld [smem:[#allocation0]]
  $region22: #{ngram_forward.1} parent=0
    _
  %s5 = ssub.s32 1, %s3
  %s6 = scalar_select 0, %s5, %s3
  $region1: #{ngram_forward.1} parent=0
    #allocation2 [shape = 'u8[4096]{0}', space=vmem, size = 0x1000, scoped, tag = 'output window, operand 0, single buffered']
    #allocation3 [shape = 's32[1]{0}', space=sflag, size = 0x4, scoped, tag = 'scoped memory for ngram_forward.1']
    %7 = vsyncpa [#allocation3], 0
    // Predicated region
    $region2: #{ngram_forward.1} parent=1 // pred_check
      _
    $region3: #{ngram_forward.1} parent=1 // pred_check_branch
      %9 = sbr.rel (0) target = $region5
    $region4: #{ngram_forward.1} parent=1 // pred_region
      _
    $region5: #{ngram_forward.1} parent=1 // pred_fallthru
      _
    // Predicated region
    $region6: #{ngram_forward.1} parent=1 // pred_check
      _
    $region7: #{ngram_forward.1} parent=1 // pred_check_branch
      %11 = sbr.rel (0) target = $region9
    $region8: #{ngram_forward.1} parent=1 // pred_region
      _
    $region9: #{ngram_forward.1} parent=1 // pred_fallthru
      _
    %p13 = scmp.eq.s32.totalorder 0, 0
    // Predicated region
    $region10: #{ngram_forward.1} parent=1 // pred_check
      %p14 = pneg %p13
    $region11: #{ngram_forward.1} parent=1 // pred_check_branch
      %16 = sbr.rel (%p14) target = $region13
    $region12: #{ngram_forward.1} parent=1 // pred_region
      %17 = vst [vmem:[#allocation2] sm:$0xff] 0.0
    $region13: #{ngram_forward.1} parent=1 // pred_fallthru
      _
    %v18 = vld [vmem:[#allocation2] sm:$0xff]
    %v19 = vld [vmem:[%s0] sm:$0xff]
    %v20 = vld [vmem:[%s1] sm:$0xff]
    %v21 = vld [vmem:[%s1 + $0x8] sm:$0xff]
    %v22 = vld [vmem:[%s1 + $0x10] sm:$0xff]
    %v23 = vld [vmem:[%s1 + $0x18] sm:$0xff]
    %v24 = vld [vmem:[%s1 + $0x20] sm:$0xff]
    %v25 = vld [vmem:[%s1 + $0x28] sm:$0xff]
    %v26 = vld [vmem:[%s1 + $0x30] sm:$0xff]
    %v27 = vld [vmem:[%s1 + $0x38] sm:$0xff]
    %v28 = vld [vmem:[%s1 + $0x40] sm:$0xff]
    %v29 = vld [vmem:[%s1 + $0x48] sm:$0xff]
    %v30 = vld [vmem:[%s1 + $0x50] sm:$0xff]
    %v31 = vld [vmem:[%s1 + $0x58] sm:$0xff]
    %v32 = vld [vmem:[%s1 + $0x60] sm:$0xff]
    %v33 = vld [vmem:[%s1 + $0x68] sm:$0xff]
    %v34 = vld [vmem:[%s1 + $0x70] sm:$0xff]
    %v35 = vld [vmem:[%s1 + $0x78] sm:$0xff]
    %v37 = vunpack.c.l.b16 %v19
    %v38 = vunpack.c.h.b16 %v19
    %v39 = vpack.c.b16 %v37, %v37
    %v40 = vpack.c.b16 %v38, %v38
    %v59 = vunpack.c.l.b16 %v20
    %v60 = vunpack.c.h.b16 %v20
    %v61 = vunpack.c.l.b16 %v21
    %v62 = vunpack.c.h.b16 %v21
    %v63 = vunpack.c.l.b16 %v22
    %v64 = vunpack.c.h.b16 %v22
    %v65 = vunpack.c.l.b16 %v23
    %v66 = vunpack.c.h.b16 %v23
    %v67 = vunpack.c.l.b16 %v24
    %v68 = vunpack.c.h.b16 %v24
    %v69 = vunpack.c.l.b16 %v25
    %v70 = vunpack.c.h.b16 %v25
    %v71 = vunpack.c.l.b16 %v26
    %v72 = vunpack.c.h.b16 %v26
    %v73 = vunpack.c.l.b16 %v27
    %v74 = vunpack.c.h.b16 %v27
    %v75 = vunpack.c.l.b16 %v28
    %v76 = vunpack.c.h.b16 %v28
    %v77 = vunpack.c.l.b16 %v29
    %v78 = vunpack.c.h.b16 %v29
    %v79 = vunpack.c.l.b16 %v30
    %v80 = vunpack.c.h.b16 %v30
    %v81 = vunpack.c.l.b16 %v31
    %v82 = vunpack.c.h.b16 %v31
    %v83 = vunpack.c.l.b16 %v32
    %v84 = vunpack.c.h.b16 %v32
    %v85 = vunpack.c.l.b16 %v33
    %v86 = vunpack.c.h.b16 %v33
    %v87 = vunpack.c.l.b16 %v34
    %v88 = vunpack.c.h.b16 %v34
    %v89 = vunpack.c.l.b16 %v35
    %v90 = vunpack.c.h.b16 %v35
    %v91 = vpack.c.b16 %v61, %v59
    %v92 = vpack.c.b16 %v62, %v60
    %v93 = vpack.c.b16 %v65, %v63
    %v94 = vpack.c.b16 %v66, %v64
    %v95 = vpack.c.b16 %v69, %v67
    %v96 = vpack.c.b16 %v70, %v68
    %v97 = vpack.c.b16 %v73, %v71
    %v98 = vpack.c.b16 %v74, %v72
    %v99 = vpack.c.b16 %v77, %v75
    %v100 = vpack.c.b16 %v78, %v76
    %v101 = vpack.c.b16 %v81, %v79
    %v102 = vpack.c.b16 %v82, %v80
    %v103 = vpack.c.b16 %v85, %v83
    %v104 = vpack.c.b16 %v86, %v84
    %v105 = vpack.c.b16 %v89, %v87
    %v106 = vpack.c.b16 %v90, %v88
    %123 = vmatprep.subr.bf16.mxu0 %v92
    %124 = vmatpush1.bf16.xpose.msra.mxu0 %v91
    %125 = vmatprep.subr.bf16.mxu0 %v94
    %126 = vmatpush1.bf16.xpose.msra.mxu0 %v93
    %127 = vmatprep.subr.bf16.mxu0 %v96
    %128 = vmatpush1.bf16.xpose.msra.mxu0 %v95
    %129 = vmatprep.subr.bf16.mxu0 %v98
    %130 = vmatpush1.bf16.xpose.msra.mxu0 %v97
    %131 = vmatprep.subr.bf16.mxu0 %v100
    %132 = vmatpush1.bf16.xpose.msra.mxu0 %v99
    %133 = vmatprep.subr.bf16.mxu0 %v102
    %134 = vmatpush1.bf16.xpose.msra.mxu0 %v101
    %135 = vmatprep.subr.bf16.mxu0 %v104
    %136 = vmatpush1.bf16.xpose.msra.mxu0 %v103
    %137 = vmatprep.subr.bf16.mxu0 %v106
    %138 = vmatpush1.bf16.xpose.msra.mxu0 %v105
    %139 = vmatprep.subr.bf16.mxu0 0
    %140 = vmatpush1.bf16.xpose.msra.mxu0 0
    %141 = vmatprep.subr.bf16.mxu0 0
    %142 = vmatpush1.bf16.xpose.msra.mxu0 0
    %143 = vmatprep.subr.bf16.mxu0 0
    %144 = vmatpush1.bf16.xpose.msra.mxu0 0
    %145 = vmatprep.subr.bf16.mxu0 0
    %146 = vmatpush1.bf16.xpose.msra.mxu0 0
    %147 = vmatprep.subr.bf16.mxu0 0
    %148 = vmatpush1.bf16.xpose.msra.mxu0 0
    %149 = vmatprep.subr.bf16.mxu0 0
    %150 = vmatpush1.bf16.xpose.msra.mxu0 0
    %151 = vmatprep.subr.bf16.mxu0 0
    %152 = vmatpush1.bf16.xpose.msra.mxu0 0
    %153 = vmatprep.subr.bf16.mxu0 0
    %154 = vmatpush1.bf16.xpose.msra.mxu0 0
    %155 = vmatprep.mubr.bf16.mxu0 %v40
    %156 = vmatmul.mubr.bf16.gmra.mrb[0].mxu0 %v39
    %v157 = vpop.f32.mrb[0].mxu0
    %v158 = vadd.f32 0.0, %v157
    %v159 = vpop.f32.mrb[0].mxu0
    %v160 = vpop.f32.mrb[0].mxu0
    %v161 = vpop.f32.mrb[0].mxu0
    %162 = vdwg.mxu0
    %v163 = vadd.f32 %v18, %v158
    %164 = vst [vmem:[#allocation2] sm:$0xff] %v163
    // Predicated region
    $region14: #{ngram_forward.1} parent=1 // pred_check
      _
    $region15: #{ngram_forward.1} parent=1 // pred_check_branch
      %166 = sbr.rel (0) target = $region17
    $region16: #{ngram_forward.1} parent=1 // pred_region
      %s168 = ssub.s32 128, 128
      %169 = vsyncadd [#allocation3], %s168
      %s171 = sshll.u32 [#allocation2], 4
      %s172 = int_to_ptr.vmem [resolvable:$true] %s171
      %174 = dma.vmem_to_hbm [thread:$0]  %s172, 128, %s2, [#allocation3]
    $region17: #{ngram_forward.1} parent=1 // pred_fallthru
      _
    // Predicated region
    $region18: #{ngram_forward.1} parent=1 // pred_check
      _
    $region19: #{ngram_forward.1} parent=1 // pred_check_branch
      %176 = sbr.rel (0) target = $region21
    $region20: #{ngram_forward.1} parent=1 // pred_region
      %177 = dma.done [#allocation3], 128
    $region21: #{ngram_forward.1} parent=1 // pred_fallthru
      _
    %178 = vsyncpa [#allocation3], 1

</llo_original>
